<compile_context>
chip_gen: v5e
topology: v5e:2x2
jax: 0.10.0
libtpu: 0.0.40
codegen_flags: <defaults>
</compile_context>

<pallas_src>
import numpy as np
import jax
import jax.numpy as jnp
from jax.experimental import pallas as pl
from jax.experimental.pallas import tpu as pltpu

EPS = 1e-12  # the PyTorch module passes eps=1e-12 explicitly


def _round_up(x, m):
    return ((x + m - 1) // m) * m


def _tpu_vmem_bytes():
    try:
        return int(pltpu.get_tpu_info().vmem_capacity_bytes)
    except Exception:
        return 64 * 1024 * 1024  # conservative: v7x per-core VMEM


def _choose_tile(num_triplets, cap):
    t128 = _round_up(max(int(num_triplets), 1), 128)
    if t128 <= 128:
        return 128
    # At least two grid tiles so both v7x TensorCores get work (grid is "parallel").
    half = _round_up((t128 + 1) // 2, 128)
    return max(128, min(cap, half))


def _split_bf16_planes(emb_t):
    """Exact split of an f32 (D, N) table into stacked bf16 hi/mid/lo planes (3D, N)."""
    hi = emb_t.astype(jnp.bfloat16)
    r1 = emb_t - hi.astype(jnp.float32)
    mid = r1.astype(jnp.bfloat16)
    lo = (r1 - mid.astype(jnp.float32)).astype(jnp.bfloat16)
    return jnp.concatenate([hi, mid, lo], axis=0)


def _distances_and_hinge(a, p, n, margin, use_cosine):
    """a/p/n: (D, T) f32 with triplets on lanes.  Returns (1, T) ap, an, hinge."""
    if use_cosine:
        # 1 - cosine_similarity with torch semantics (each norm clamped to eps);
        # anchor norm hoisted and computed once.
        ss_a = jnp.sum(a * a, axis=0, keepdims=True)
        inv_a = jax.lax.rsqrt(jnp.maximum(ss_a, EPS * EPS))

        def cos_dist(y):
            dot = jnp.sum(a * y, axis=0, keepdims=True)
            ss_y = jnp.sum(y * y, axis=0, keepdims=True)
            return 1.0 - dot * inv_a * jax.lax.rsqrt(jnp.maximum(ss_y, EPS * EPS))

        ap = cos_dist(p)
        an = cos_dist(n)
    else:
        # F.pairwise_distance(x, y, p=2, eps=1e-12) = || x - y + eps ||_2
        dap = a - p + EPS
        dan = a - n + EPS
        ap = jnp.sqrt(jnp.sum(dap * dap, axis=0, keepdims=True))
        an = jnp.sqrt(jnp.sum(dan * dan, axis=0, keepdims=True))
    hinge = jnp.maximum(ap - an + jnp.float32(margin), 0.0)
    return ap, an, hinge


def _make_gather_kernel(margin, use_cosine, d_pad, t_tile):
    margin = float(margin)

    def kernel(idx_ref, planes_ref, out_ref):
        planes = planes_ref[...]                 # (3*D_pad, N_pad) bf16, VMEM-resident
        idx = idx_ref[...]                       # (1, 3*T_TILE) int32: [a | p | n]
        n_emb = planes.shape[1]

        # Fused exact one-hot gather: single native-bf16 MXU matmul.
        row_iota = jax.lax.broadcasted_iota(jnp.int32, (n_emb, 3 * t_tile), 0)
        onehot = (idx == row_iota).astype(jnp.bfloat16)          # (N_pad, 3T), exact 0/1

        g3 = jax.lax.dot(planes, onehot,
                         preferred_element_type=jnp.float32)      # (3*D_pad, 3T) f32
        # Exact f32 reconstruction of the gathered embeddings: hi + mid + lo.
        g = g3[0:d_pad, :] + g3[d_pad:2 * d_pad, :] + g3[2 * d_pad:3 * d_pad, :]

        a = g[:, 0:t_tile]
        p = g[:, t_tile:2 * t_tile]
        n = g[:, 2 * t_tile:3 * t_tile]

        ap, an, hinge = _distances_and_hinge(a, p, n, margin, use_cosine)
        out_ref[0:1, :] = ap
        out_ref[1:2, :] = an
        out_ref[2:3, :] = hinge

    return kernel


def _make_streamed_kernel(margin, use_cosine):
    margin = float(margin)

    def kernel(a_ref, p_ref, n_ref, out_ref):
        ap, an, hinge = _distances_and_hinge(a_ref[...], p_ref[...], n_ref[...],
                                             margin, use_cosine)
        out_ref[0:1, :] = ap
        out_ref[1:2, :] = an
        out_ref[2:3, :] = hinge

    return kernel


def online_triplet_loss(embeddings, triplets, margin, use_cosine=False,
                        gather_in_kernel=None):
    """Pallas-backed OnlineTripletLoss.forward given precomputed triplet indices.

    embeddings: [N, D] float32
    triplets:   [T, 3] int32 rows of (anchor, positive, negative)
    Returns a dict mirroring the PyTorch loss_outputs (or None if no triplets).
    """
    if triplets is None:
        return None

    embeddings = jnp.asarray(embeddings, jnp.float32)
    triplets = jnp.asarray(triplets, jnp.int32)
    N, D = int(embeddings.shape[0]), int(embeddings.shape[1])
    T = int(triplets.shape[0])

    # Generation-aware knobs (v5e/v6e: 128 MiB VMEM -> bigger tiles; v7x: 64 MiB).
    vmem_cap = _tpu_vmem_bytes()
    big_vmem = vmem_cap >= 100 * 1024 * 1024
    tile_cap = 2048 if big_vmem else 1024
    vmem_limit = (64 if big_vmem else 32) * 1024 * 1024
    table_budget = vmem_limit // 4

    T_TILE = _choose_tile(T, tile_cap)
    T_pad = _round_up(T, T_TILE)
    num_tiles = T_pad // T_TILE

    # Padded table dims (lane/sublane friendly for the bf16 MXU gather).
    D_pad = _round_up(D, 16)
    N_pad = _round_up(N, 128)
    table_bytes = 3 * D_pad * N_pad * 2  # three bf16 planes

    if gather_in_kernel is None:
        # In-kernel gather costs ~3*N*D MACs/triplet; the streamed path costs
        # ~12*D HBM bytes/triplet.  Prefer the streamed path for large N.
        gather_in_kernel = (table_bytes <= table_budget) and (N <= 1024)

    compiler_params = pltpu.CompilerParams(
        dimension_semantics=("parallel",),
        vmem_limit_bytes=vmem_limit,
    )

    if gather_in_kernel:
        # Lane-dense fused index layout: tile i holds [a(T_TILE) | p(T_TILE) | n(T_TILE)].
        trips_pad = jnp.zeros((T_pad, 3), jnp.int32).at[:T, :].set(triplets)
        idx_flat = (trips_pad.reshape(num_tiles, T_TILE, 3)
                    .transpose(0, 2, 1)
                    .reshape(1, 3 * T_pad))

        emb_t = jnp.zeros((D_pad, N_pad), jnp.float32).at[:D, :N].set(embeddings.T)
        planes = _split_bf16_planes(emb_t)                       # (3*D_pad, N_pad) bf16

        kernel = _make_gather_kernel(margin, bool(use_cosine), D_pad, T_TILE)
        cost = pl.CostEstimate(
            flops=int(num_tiles * (2 * 3 * D_pad * N_pad * 3 * T_TILE
                                   + 10 * D_pad * T_TILE)),
            transcendentals=int(4 * T_pad),
            bytes_accessed=int(idx_flat.size * 4 + planes.size * 2 + 3 * T_pad * 4),
        )

        out = pl.pallas_call(
            kernel,
            out_shape=jax.ShapeDtypeStruct((3, T_pad), jnp.float32),
            grid=(num_tiles,),
            in_specs=[
                pl.BlockSpec((1, 3 * T_TILE), lambda i: (0, i)),   # streamed index tiles
                # Whole bf16 table resident in VMEM, single-buffered (no per-step DMA).
                pl.BlockSpec(memory_space=pltpu.MemorySpace.VMEM),
            ],
            out_specs=pl.BlockSpec((3, T_TILE), lambda i: (0, i)),
            compiler_params=compiler_params,
            cost_estimate=cost,
        )(idx_flat, planes)
    else:
        # Streaming fallback for large N: gather in the wrapper, stream (D, T_TILE) tiles.
        def to_dt(col):
            x = embeddings[triplets[:, col]]                                   # (T, D)
            return jnp.zeros((T_pad, D), jnp.float32).at[:T].set(x).T          # (D, T_pad)

        a_dt, p_dt, n_dt = to_dt(0), to_dt(1), to_dt(2)
        kernel = _make_streamed_kernel(margin, bool(use_cosine))
        cost = pl.CostEstimate(
            flops=int(num_tiles * 10 * D * T_TILE),
            transcendentals=int(4 * T_pad),
            bytes_accessed=int(3 * D * T_pad * 4 + 3 * T_pad * 4),
        )
        spec = pl.BlockSpec((D, T_TILE), lambda i: (0, i))

        out = pl.pallas_call(
            kernel,
            out_shape=jax.ShapeDtypeStruct((3, T_pad), jnp.float32),
            grid=(num_tiles,),
            in_specs=[spec, spec, spec],
            out_specs=pl.BlockSpec((3, T_TILE), lambda i: (0, i)),
            compiler_params=compiler_params,
            cost_estimate=cost,
        )(a_dt, p_dt, n_dt)

    ap_distances = out[0, :T]
    an_distances = out[1, :T]
    loss = jnp.sum(out[2, :T]) * jnp.float32(1.0 / T)     # mean via precomputed 1/T

    loss_outputs = {
        "loss": loss,
        "triplet_pos_distances": ap_distances,
        "triplet_neg_distances": an_distances,
        "triplet_distances": jnp.concatenate([ap_distances, an_distances], axis=0),
        "triplet_targets": jnp.concatenate(
            [jnp.ones((T,), jnp.float32), jnp.zeros((T,), jnp.float32)], axis=0
        ),
    }
    return loss_outputs


def all_triplets_selector(labels):
    """Deterministic 'all valid triplets' selector (stand-in for triplet_selector)."""
    labels = np.asarray(labels)
    trips = []
    for i in range(len(labels)):
        for j in range(len(labels)):
            if j == i or labels[j] != labels[i]:
                continue
            for k in range(len(labels)):
                if labels[k] == labels[i]:
                    continue
                trips.append((i, j, k))
    if not trips:
        return None
    return np.asarray(trips, dtype=np.int32)


def _reference(embeddings, triplets, margin, use_cosine):
    """Plain-JAX forward with the same semantics as the PyTorch module."""
    a = embeddings[triplets[:, 0]]
    p = embeddings[triplets[:, 1]]
    n = embeddings[triplets[:, 2]]
    if use_cosine:
        def cos(x, y):
            dot = jnp.sum(x * y, axis=-1)
            nx = jnp.sqrt(jnp.sum(x * x, axis=-1))
            ny = jnp.sqrt(jnp.sum(y * y, axis=-1))
            return dot / (jnp.maximum(nx, EPS) * jnp.maximum(ny, EPS))
        ap = 1.0 - cos(a, p)
        an = 1.0 - cos(a, n)
    else:
        ap = jnp.sqrt(jnp.sum((a - p + EPS) ** 2, axis=-1))
        an = jnp.sqrt(jnp.sum((a - n + EPS) ** 2, axis=-1))
    loss = jnp.mean(jnp.maximum(ap - an + margin, 0.0))
    return ap, an, loss


if __name__ == "__main__":
    key = jax.random.PRNGKey(0)
    margin = 1.0

    # A single-tile case (T=96) and a multi-tile one (T=896).
    cases = [(8, 32), (16, 32)]
    for (N, D) in cases:
        key, k1 = jax.random.split(key)
        embeddings = jax.random.normal(k1, (N, D), dtype=jnp.float32)
        labels = np.array([0] * (N // 2) + [1] * (N // 2), dtype=np.int32)
        triplets = all_triplets_selector(labels)
        assert triplets is not None, "not enough triplets"
        triplets_j = jnp.asarray(triplets, jnp.int32)

        for use_cosine in (False, True):
            for in_kernel_gather in (True, False):   # exercise both paths
                out = online_triplet_loss(embeddings, triplets, margin,
                                          use_cosine=use_cosine,
                                          gather_in_kernel=in_kernel_gather)
                jax.block_until_ready(out["loss"])

                ap_ref, an_ref, loss_ref = _reference(embeddings, triplets_j,
                                                      margin, use_cosine)
                tag = f"(N={N}, cosine={use_cosine}, gather={in_kernel_gather})"
                assert jnp.allclose(out["triplet_pos_distances"], ap_ref,
                                    atol=1e-4, rtol=1e-4), f"ap mismatch {tag}"
                assert jnp.allclose(out["triplet_neg_distances"], an_ref,
                                    atol=1e-4, rtol=1e-4), f"an mismatch {tag}"
                assert jnp.allclose(out["loss"], loss_ref,
                                    atol=1e-4, rtol=1e-4), f"loss mismatch {tag}"
                assert out["triplet_distances"].shape == (2 * triplets.shape[0],)
                assert out["triplet_targets"].shape == (2 * triplets.shape[0],)

    print("KERNEL_OK")
</pallas_src>

<mosaic_0001>
module attributes {stable_mosaic.version = 11 : i64} {
  func.func @kernel(%arg0: i32, %arg1: memref<1x384xi32, #tpu.memory_space<vmem>>, %arg2: memref<96x128xbf16, #tpu.memory_space<vmem>>, %arg3: memref<3x128xf32, #tpu.memory_space<vmem>>) attributes {dimension_semantics = [#tpu.dimension_semantics<parallel>], iteration_bounds = array<i64: 1>, scalar_prefetch = 0 : i64, scratch_operands = 0 : i64, tpu.core_type = #tpu.core_type<tc>, window_params = [{transform_indices = @transform_0, window_bounds = array<i64: 1, 384>}, {pipeline_mode = #tpu.pipeline_mode<synchronous>, transform_indices = @transform_1, window_bounds = array<i64: 96, 128>}, {transform_indices = @transform_2, window_bounds = array<i64: 3, 128>}]} {
    %c0 = arith.constant 0 : index
    %c0_0 = arith.constant 0 : index
    %0 = vector.load %arg2[%c0, %c0_0] : memref<96x128xbf16, #tpu.memory_space<vmem>>, vector<96x128xbf16>
    %c0_1 = arith.constant 0 : index
    %c0_2 = arith.constant 0 : index
    %1 = vector.load %arg1[%c0_1, %c0_2] : memref<1x384xi32, #tpu.memory_space<vmem>>, vector<1x384xi32>
    %2 = tpu.iota {dimensions = array<i32: 0>} : vector<128x384xi32>
    %3 = vector.broadcast %1 : vector<1x384xi32> to vector<128x384xi32>
    %4 = arith.cmpi eq, %3, %2 : vector<128x384xi32>
    %5 = arith.extui %4 : vector<128x384xi1> to vector<128x384xi32>
    %6 = arith.sitofp %5 : vector<128x384xi32> to vector<128x384xf32>
    %7 = arith.truncf %6 : vector<128x384xf32> to vector<128x384xbf16>
    %cst = arith.constant dense<0.000000e+00> : vector<96x384xf32>
    %8 = tpu.matmul %0, %7, %cst {dimension_numbers = #tpu.dot_dimension_numbers<[1], [0], [0], [1], [0, 0, 1, 1], [], []>} : vector<96x128xbf16>, vector<128x384xbf16>, vector<96x384xf32> -> vector<96x384xf32>
    %9 = vector.extract_strided_slice %8 {offsets = [0, 0], sizes = [32, 384], strides = [1, 1]} : vector<96x384xf32> to vector<32x384xf32>
    %10 = vector.extract_strided_slice %8 {offsets = [32, 0], sizes = [32, 384], strides = [1, 1]} : vector<96x384xf32> to vector<32x384xf32>
    %11 = arith.addf %9, %10 : vector<32x384xf32>
    %12 = vector.extract_strided_slice %8 {offsets = [64, 0], sizes = [32, 384], strides = [1, 1]} : vector<96x384xf32> to vector<32x384xf32>
    %13 = arith.addf %11, %12 : vector<32x384xf32>
    %14 = vector.extract_strided_slice %13 {offsets = [0, 0], sizes = [32, 128], strides = [1, 1]} : vector<32x384xf32> to vector<32x128xf32>
    %15 = vector.extract_strided_slice %13 {offsets = [0, 128], sizes = [32, 128], strides = [1, 1]} : vector<32x384xf32> to vector<32x128xf32>
    %16 = vector.extract_strided_slice %13 {offsets = [0, 256], sizes = [32, 128], strides = [1, 1]} : vector<32x384xf32> to vector<32x128xf32>
    %17 = arith.subf %14, %15 : vector<32x128xf32>
    %cst_3 = arith.constant 9.99999996E-13 : f32
    %18 = vector.broadcast %cst_3 : f32 to vector<32x128xf32>
    %19 = arith.addf %17, %18 : vector<32x128xf32>
    %20 = arith.subf %14, %16 : vector<32x128xf32>
    %cst_4 = arith.constant 9.99999996E-13 : f32
    %21 = vector.broadcast %cst_4 : f32 to vector<32x128xf32>
    %22 = arith.addf %20, %21 : vector<32x128xf32>
    %23 = arith.mulf %19, %19 : vector<32x128xf32>
    %cst_5 = arith.constant dense<0.000000e+00> : vector<128xf32>
    %24 = vector.multi_reduction <add>, %23, %cst_5 [0] : vector<32x128xf32> to vector<128xf32>
    %25 = vector.shape_cast %24 : vector<128xf32> to vector<1x128xf32>
    %26 = math.sqrt %25 : vector<1x128xf32>
    %27 = arith.mulf %22, %22 : vector<32x128xf32>
    %cst_6 = arith.constant dense<0.000000e+00> : vector<128xf32>
    %28 = vector.multi_reduction <add>, %27, %cst_6 [0] : vector<32x128xf32> to vector<128xf32>
    %29 = vector.shape_cast %28 : vector<128xf32> to vector<1x128xf32>
    %30 = math.sqrt %29 : vector<1x128xf32>
    %31 = arith.subf %26, %30 : vector<1x128xf32>
    %cst_7 = arith.constant 1.000000e+00 : f32
    %32 = vector.broadcast %cst_7 : f32 to vector<1x128xf32>
    %33 = arith.addf %31, %32 : vector<1x128xf32>
    %cst_8 = arith.constant 0.000000e+00 : f32
    %34 = vector.broadcast %cst_8 : f32 to vector<1x128xf32>
    %35 = arith.maximumf %33, %34 : vector<1x128xf32>
    %c0_9 = arith.constant 0 : index
    %c0_10 = arith.constant 0 : index
    %36 = vector.load %arg3[%c0_9, %c0_10] : memref<3x128xf32, #tpu.memory_space<vmem>>, vector<1x128xf32>
    tpu.vector_store %arg3[%c0_9, %c0_10], %26 {strides = array<i32>} : memref<3x128xf32, #tpu.memory_space<vmem>>, vector<1x128xf32>,
    %c1 = arith.constant 1 : index
    %c0_11 = arith.constant 0 : index
    %37 = vector.load %arg3[%c1, %c0_11] : memref<3x128xf32, #tpu.memory_space<vmem>>, vector<1x128xf32>
    tpu.vector_store %arg3[%c1, %c0_11], %30 {strides = array<i32>} : memref<3x128xf32, #tpu.memory_space<vmem>>, vector<1x128xf32>,
    %c2 = arith.constant 2 : index
    %c0_12 = arith.constant 0 : index
    %38 = vector.load %arg3[%c2, %c0_12] : memref<3x128xf32, #tpu.memory_space<vmem>>, vector<1x128xf32>
    tpu.vector_store %arg3[%c2, %c0_12], %35 {strides = array<i32>} : memref<3x128xf32, #tpu.memory_space<vmem>>, vector<1x128xf32>,
    return
  }
  func.func @transform_0(%arg0: i32) -> (i32, i32) {
    %c0_i32 = arith.constant 0 : i32
    %c0_i32_0 = arith.constant 0 : i32
    return %c0_i32, %arg0 : i32, i32
  }
  func.func @transform_1(%arg0: i32) -> (i32, i32) {
    %c0_i32 = arith.constant 0 : i32
    %c0_i32_0 = arith.constant 0 : i32
    %c0_i32_1 = arith.constant 0 : i32
    return %c0_i32, %c0_i32_0 : i32, i32
  }
  func.func @transform_2(%arg0: i32) -> (i32, i32) {
    %c0_i32 = arith.constant 0 : i32
    %c0_i32_0 = arith.constant 0 : i32
    return %c0_i32, %arg0 : i32, i32
  }
}

</mosaic_0001>

<llo_original>
// kernel: tpu_custom_call.1
$region0: #{tpu_custom_call.1}
  #allocation0 [shape = 'u32[]', space=smem, size = 0x4, offset = 0x4, fixed_abs, tag = 'smem constant byte address 0x4 - core index']
  #allocation1 [shape = 'u32[72,128]{1,0:T(1,128)}', space=vmem, size = 0x9000, scoped, tag = 'internal scratch']
  %s0 = inlined_call_operand.hbm [shape: s32[1,384], index: 0, kind: input, shape index: {}]
  %s1 = inlined_call_operand.hbm [shape: bf16[96,128], index: 1, kind: input, shape index: {}]
  %s2 = inlined_call_operand.hbm [shape: f32[3,128], index: 2, kind: output, shape index: {}]
  %s3 = sld [smem:[#allocation0]]
  $region26: #{tpu_custom_call.1} parent=0
    _
  %s5 = ssub.s32 1, %s3
  %s6 = scalar_select 0, %s5, %s3
  $region1: #{tpu_custom_call.1} parent=0
    #allocation2 [shape = 'u8[1536]{0}', space=vmem, size = 0x800, scoped, tag = 'input window, operand 0, single buffered']
    #allocation3 [shape = 's32[1]{0}', space=sflag, size = 0x4, scoped, tag = 'scoped memory for tpu_custom_call.1']
    #allocation4 [shape = 's32[1]{0}', space=sflag, size = 0x4, scoped, tag = 'scoped memory for tpu_custom_call.1']
    #allocation5 [shape = 'u8[24576]{0}', space=vmem, size = 0x6000, scoped, tag = 'input window, operand 1, single buffered']
    #allocation6 [shape = 's32[1]{0}', space=sflag, size = 0x4, scoped, tag = 'scoped memory for tpu_custom_call.1']
    #allocation7 [shape = 'u8[2048]{0}', space=vmem, size = 0x800, scoped, tag = 'output window, operand 0, single buffered']
    %7 = vsyncpa [#allocation3], 0
    %8 = vsyncpa [#allocation6], 0
    %9 = vsyncpa [#allocation4], 0
    // Predicated region
    $region2: #{tpu_custom_call.1} parent=1 // pred_check
      _
    $region3: #{tpu_custom_call.1} parent=1 // pred_check_branch
      %11 = sbr.rel (0) target = $region5
    $region4: #{tpu_custom_call.1} parent=1 // pred_region
      %13 = vsyncadd [#allocation3], 0
      %s15 = sshll.u32 %s0, 4
      %s16 = int_to_ptr.hbm [resolvable:$true] %s15
      %s17 = sshll.u32 [#allocation2], 4
      %s18 = int_to_ptr.vmem [resolvable:$true] %s17
      %20 = dma.hbm_to_vmem [thread:$0]  %s16, 48, %s18, [#allocation3]
    $region5: #{tpu_custom_call.1} parent=1 // pred_fallthru
      _
    // Predicated region
    $region6: #{tpu_custom_call.1} parent=1 // pred_check
      _
    $region7: #{tpu_custom_call.1} parent=1 // pred_check_branch
      %22 = sbr.rel (0) target = $region9
    $region8: #{tpu_custom_call.1} parent=1 // pred_region
      %24 = vsyncadd [#allocation6], 0
      %s25 = sshll.u32 %s1, 4
      %s26 = int_to_ptr.hbm [resolvable:$true] %s25
      %s27 = sshll.u32 [#allocation5], 4
      %s28 = int_to_ptr.vmem [resolvable:$true] %s27
      %33 = dma.hbm_to_vmem [thread:$0]  %s26, 768, %s28, [#allocation6], 64, 64, 4
    $region9: #{tpu_custom_call.1} parent=1 // pred_fallthru
      _
    // Predicated region
    $region10: #{tpu_custom_call.1} parent=1 // pred_check
      _
    $region11: #{tpu_custom_call.1} parent=1 // pred_check_branch
      %35 = sbr.rel (0) target = $region13
    $region12: #{tpu_custom_call.1} parent=1 // pred_region
      %37 = dma.done [#allocation3], 48
    $region13: #{tpu_custom_call.1} parent=1 // pred_fallthru
      _
    // Predicated region
    $region14: #{tpu_custom_call.1} parent=1 // pred_check
      _
    $region15: #{tpu_custom_call.1} parent=1 // pred_check_branch
      %39 = sbr.rel (0) target = $region17
    $region16: #{tpu_custom_call.1} parent=1 // pred_region
      %41 = dma.done [#allocation6], 768
    $region17: #{tpu_custom_call.1} parent=1 // pred_fallthru
      _
    %v42 = vld [vmem:[#allocation5] sm:$0xf]
    %v43 = vld [vmem:[#allocation5 + $0x4] sm:$0xf]
    %v44 = vld [vmem:[#allocation5 + $0x8] sm:$0xf]
    %v45 = vld [vmem:[#allocation5 + $0xc] sm:$0xf]
    %v46 = vld [vmem:[#allocation5 + $0x10] sm:$0xf]
    %v47 = vld [vmem:[#allocation5 + $0x14] sm:$0xf]
    %v48 = vld [vmem:[#allocation5 + $0x18] sm:$0xf]
    %v49 = vld [vmem:[#allocation5 + $0x1c] sm:$0xf]
    %v50 = vld [vmem:[#allocation5 + $0x20] sm:$0xf]
    %v51 = vld [vmem:[#allocation5 + $0x24] sm:$0xf]
    %v52 = vld [vmem:[#allocation5 + $0x28] sm:$0xf]
    %v53 = vld [vmem:[#allocation5 + $0x2c] sm:$0xf]
    %v54 = vld [vmem:[#allocation2] sm:$0x7]
    %v55 = vlaneseq
    %v56 = vshrl.u32 %v55, 7
    %v57 = vadd.s32 %v56, 8
    %v58 = vadd.s32 %v56, 16
    %v59 = vadd.s32 %v56, 24
    %v60 = vadd.s32 %v56, 32
    %v61 = vadd.s32 %v56, 40
    %v62 = vadd.s32 %v56, 48
    %v63 = vadd.s32 %v56, 56
    %v64 = vadd.s32 %v56, 64
    %v65 = vadd.s32 %v56, 72
    %v66 = vadd.s32 %v56, 80
    %v67 = vadd.s32 %v56, 88
    %v68 = vadd.s32 %v56, 96
    %v69 = vadd.s32 %v56, 104
    %v70 = vadd.s32 %v56, 112
    %v71 = vadd.s32 %v56, 120
    %v72 = vperm.slane %v54, 0
    %v73 = vperm.slane %v54, 1
    %v74 = vperm.slane %v54, 2
    %vm75 = vcmp.eq.s32.totalorder %v72, %v56
    %vm76 = vcmp.eq.s32.totalorder %v73, %v56
    %vm77 = vcmp.eq.s32.totalorder %v74, %v56
    %vm78 = vcmp.eq.s32.totalorder %v72, %v57
    %vm79 = vcmp.eq.s32.totalorder %v73, %v57
    %vm80 = vcmp.eq.s32.totalorder %v74, %v57
    %vm81 = vcmp.eq.s32.totalorder %v72, %v58
    %vm82 = vcmp.eq.s32.totalorder %v73, %v58
    %vm83 = vcmp.eq.s32.totalorder %v74, %v58
    %vm84 = vcmp.eq.s32.totalorder %v72, %v59
    %vm85 = vcmp.eq.s32.totalorder %v73, %v59
    %vm86 = vcmp.eq.s32.totalorder %v74, %v59
    %vm87 = vcmp.eq.s32.totalorder %v72, %v60
    %vm88 = vcmp.eq.s32.totalorder %v73, %v60
    %vm89 = vcmp.eq.s32.totalorder %v74, %v60
    %vm90 = vcmp.eq.s32.totalorder %v72, %v61
    %vm91 = vcmp.eq.s32.totalorder %v73, %v61
    %vm92 = vcmp.eq.s32.totalorder %v74, %v61
    %vm93 = vcmp.eq.s32.totalorder %v72, %v62
    %vm94 = vcmp.eq.s32.totalorder %v73, %v62
    %vm95 = vcmp.eq.s32.totalorder %v74, %v62
    %vm96 = vcmp.eq.s32.totalorder %v72, %v63
    %vm97 = vcmp.eq.s32.totalorder %v73, %v63
    %vm98 = vcmp.eq.s32.totalorder %v74, %v63
    %vm99 = vcmp.eq.s32.totalorder %v72, %v64
    %vm100 = vcmp.eq.s32.totalorder %v73, %v64
    %vm101 = vcmp.eq.s32.totalorder %v74, %v64
    %vm102 = vcmp.eq.s32.totalorder %v72, %v65
    %vm103 = vcmp.eq.s32.totalorder %v73, %v65
    %vm104 = vcmp.eq.s32.totalorder %v74, %v65
    %vm105 = vcmp.eq.s32.totalorder %v72, %v66
    %vm106 = vcmp.eq.s32.totalorder %v73, %v66
    %vm107 = vcmp.eq.s32.totalorder %v74, %v66
    %vm108 = vcmp.eq.s32.totalorder %v72, %v67
    %vm109 = vcmp.eq.s32.totalorder %v73, %v67
    %vm110 = vcmp.eq.s32.totalorder %v74, %v67
    %vm111 = vcmp.eq.s32.totalorder %v72, %v68
    %vm112 = vcmp.eq.s32.totalorder %v73, %v68
    %vm113 = vcmp.eq.s32.totalorder %v74, %v68
    %vm114 = vcmp.eq.s32.totalorder %v72, %v69
    %vm115 = vcmp.eq.s32.totalorder %v73, %v69
    %vm116 = vcmp.eq.s32.totalorder %v74, %v69
    %vm117 = vcmp.eq.s32.totalorder %v72, %v70
    %vm118 = vcmp.eq.s32.totalorder %v73, %v70
    %vm119 = vcmp.eq.s32.totalorder %v74, %v70
    %vm120 = vcmp.eq.s32.totalorder %v72, %v71
    %vm121 = vcmp.eq.s32.totalorder %v73, %v71
    %vm122 = vcmp.eq.s32.totalorder %v74, %v71
    %v123 = vsel %vm75, 1, 0
    %v124 = vsel %vm76, 1, 0
    %v125 = vsel %vm77, 1, 0
    %v126 = vsel %vm78, 1, 0
    %v127 = vsel %vm79, 1, 0
    %v128 = vsel %vm80, 1, 0
    %v129 = vsel %vm81, 1, 0
    %v130 = vsel %vm82, 1, 0
    %v131 = vsel %vm83, 1, 0
    %v132 = vsel %vm84, 1, 0
    %v133 = vsel %vm85, 1, 0
    %v134 = vsel %vm86, 1, 0
    %v135 = vsel %vm87, 1, 0
    %v136 = vsel %vm88, 1, 0
    %v137 = vsel %vm89, 1, 0
    %v138 = vsel %vm90, 1, 0
    %v139 = vsel %vm91, 1, 0
    %v140 = vsel %vm92, 1, 0
    %v141 = vsel %vm93, 1, 0
    %v142 = vsel %vm94, 1, 0
    %v143 = vsel %vm95, 1, 0
    %v144 = vsel %vm96, 1, 0
    %v145 = vsel %vm97, 1, 0
    %v146 = vsel %vm98, 1, 0
    %v147 = vsel %vm99, 1, 0
    %v148 = vsel %vm100, 1, 0
    %v149 = vsel %vm101, 1, 0
    %v150 = vsel %vm102, 1, 0
    %v151 = vsel %vm103, 1, 0
    %v152 = vsel %vm104, 1, 0
    %v153 = vsel %vm105, 1, 0
    %v154 = vsel %vm106, 1, 0
    %v155 = vsel %vm107, 1, 0
    %v156 = vsel %vm108, 1, 0
    %v157 = vsel %vm109, 1, 0
    %v158 = vsel %vm110, 1, 0
    %v159 = vsel %vm111, 1, 0
    %v160 = vsel %vm112, 1, 0
    %v161 = vsel %vm113, 1, 0
    %v162 = vsel %vm114, 1, 0
    %v163 = vsel %vm115, 1, 0
    %v164 = vsel %vm116, 1, 0
    %v165 = vsel %vm117, 1, 0
    %v166 = vsel %vm118, 1, 0
    %v167 = vsel %vm119, 1, 0
    %v168 = vsel %vm120, 1, 0
    %v169 = vsel %vm121, 1, 0
    %v170 = vsel %vm122, 1, 0
    %v171 = vcvt.s32.f32 %v123
    %v172 = vcvt.s32.f32 %v124
    %v173 = vcvt.s32.f32 %v125
    %v174 = vcvt.s32.f32 %v126
    %v175 = vcvt.s32.f32 %v127
    %v176 = vcvt.s32.f32 %v128
    %v177 = vcvt.s32.f32 %v129
    %v178 = vcvt.s32.f32 %v130
    %v179 = vcvt.s32.f32 %v131
    %v180 = vcvt.s32.f32 %v132
    %v181 = vcvt.s32.f32 %v133
    %v182 = vcvt.s32.f32 %v134
    %v183 = vcvt.s32.f32 %v135
    %v184 = vcvt.s32.f32 %v136
    %v185 = vcvt.s32.f32 %v137
    %v186 = vcvt.s32.f32 %v138
    %v187 = vcvt.s32.f32 %v139
    %v188 = vcvt.s32.f32 %v140
    %v189 = vcvt.s32.f32 %v141
    %v190 = vcvt.s32.f32 %v142
    %v191 = vcvt.s32.f32 %v143
    %v192 = vcvt.s32.f32 %v144
    %v193 = vcvt.s32.f32 %v145
    %v194 = vcvt.s32.f32 %v146
    %v195 = vcvt.s32.f32 %v147
    %v196 = vcvt.s32.f32 %v148
    %v197 = vcvt.s32.f32 %v149
    %v198 = vcvt.s32.f32 %v150
    %v199 = vcvt.s32.f32 %v151
    %v200 = vcvt.s32.f32 %v152
    %v201 = vcvt.s32.f32 %v153
    %v202 = vcvt.s32.f32 %v154
    %v203 = vcvt.s32.f32 %v155
    %v204 = vcvt.s32.f32 %v156
    %v205 = vcvt.s32.f32 %v157
    %v206 = vcvt.s32.f32 %v158
    %v207 = vcvt.s32.f32 %v159
    %v208 = vcvt.s32.f32 %v160
    %v209 = vcvt.s32.f32 %v161
    %v210 = vcvt.s32.f32 %v162
    %v211 = vcvt.s32.f32 %v163
    %v212 = vcvt.s32.f32 %v164
    %v213 = vcvt.s32.f32 %v165
    %v214 = vcvt.s32.f32 %v166
    %v215 = vcvt.s32.f32 %v167
    %v216 = vcvt.s32.f32 %v168
    %v217 = vcvt.s32.f32 %v169
    %v218 = vcvt.s32.f32 %v170
    %v219 = vpack.c.bf16 %v174, %v171
    %v220 = vpack.c.bf16 %v175, %v172
    %v221 = vpack.c.bf16 %v176, %v173
    %v222 = vpack.c.bf16 %v180, %v177
    %v223 = vpack.c.bf16 %v181, %v178
    %v224 = vpack.c.bf16 %v182, %v179
    %v225 = vpack.c.bf16 %v186, %v183
    %v226 = vpack.c.bf16 %v187, %v184
    %v227 = vpack.c.bf16 %v188, %v185
    %v228 = vpack.c.bf16 %v192, %v189
    %v229 = vpack.c.bf16 %v193, %v190
    %v230 = vpack.c.bf16 %v194, %v191
    %v231 = vpack.c.bf16 %v198, %v195
    %v232 = vpack.c.bf16 %v199, %v196
    %v233 = vpack.c.bf16 %v200, %v197
    %v234 = vpack.c.bf16 %v204, %v201
    %v235 = vpack.c.bf16 %v205, %v202
    %v236 = vpack.c.bf16 %v206, %v203
    %v237 = vpack.c.bf16 %v210, %v207
    %v238 = vpack.c.bf16 %v211, %v208
    %v239 = vpack.c.bf16 %v212, %v209
    %v240 = vpack.c.bf16 %v216, %v213
    %v241 = vpack.c.bf16 %v217, %v214
    %v242 = vpack.c.bf16 %v218, %v215
    %v255 = vunpack.c.l.b16 %v42
    %v256 = vunpack.c.l.b16 %v43
    %v257 = vunpack.c.l.b16 %v44
    %v258 = vunpack.c.l.b16 %v45
    %v259 = vunpack.c.l.b16 %v46
    %v260 = vunpack.c.l.b16 %v47
    %v261 = vunpack.c.l.b16 %v48
    %v262 = vunpack.c.l.b16 %v49
    %v263 = vunpack.c.l.b16 %v50
    %v264 = vunpack.c.l.b16 %v51
    %v265 = vunpack.c.l.b16 %v52
    %v266 = vunpack.c.l.b16 %v53
    %v267 = vpack.c.b16 %v256, %v255
    %v268 = vpack.c.b16 %v258, %v257
    %v269 = vpack.c.b16 %v260, %v259
    %v270 = vpack.c.b16 %v262, %v261
    %v271 = vpack.c.b16 %v264, %v263
    %v272 = vpack.c.b16 %v266, %v265
    %279 = vmatpush.bf16.msra.mxu0 %v240
    %280 = vmatpush.bf16.msra.mxu0 %v237
    %281 = vmatpush.bf16.msra.mxu0 %v234
    %282 = vmatpush.bf16.msra.mxu0 %v231
    %283 = vmatpush.bf16.msra.mxu0 %v228
    %284 = vmatpush.bf16.msra.mxu0 %v225
    %285 = vmatpush.bf16.msra.mxu0 %v222
    %286 = vmatpush.bf16.msra.mxu0 %v219
    %287 = vmatmul.bf16.gmra.mxu0 %v267
    %v288 = vpop.f32.mrf.mxu0
    %v289 = vadd.f32 0.0, %v288
    %v290 = vpop.f32.mrf.mxu0
    %v291 = vadd.f32 0.0, %v290
    %292 = vmatmul.bf16.gmra.mxu0 %v268
    %v293 = vpop.f32.mrf.mxu0
    %v294 = vadd.f32 0.0, %v293
    %v295 = vpop.f32.mrf.mxu0
    %v296 = vadd.f32 0.0, %v295
    %297 = vmatmul.bf16.gmra.mxu0 %v269
    %v298 = vpop.f32.mrf.mxu0
    %v299 = vadd.f32 0.0, %v298
    %v300 = vpop.f32.mrf.mxu0
    %v301 = vadd.f32 0.0, %v300
    %302 = vmatmul.bf16.gmra.mxu0 %v270
    %v303 = vpop.f32.mrf.mxu0
    %v304 = vadd.f32 0.0, %v303
    %v305 = vpop.f32.mrf.mxu0
    %v306 = vadd.f32 0.0, %v305
    %307 = vmatmul.bf16.gmra.mxu0 %v271
    %v308 = vpop.f32.mrf.mxu0
    %v309 = vadd.f32 0.0, %v308
    %v310 = vpop.f32.mrf.mxu0
    %v311 = vadd.f32 0.0, %v310
    %312 = vmatmul.bf16.gmra.mxu0 %v272
    %v313 = vpop.f32.mrf.mxu0
    %v314 = vadd.f32 0.0, %v313
    %v315 = vpop.f32.mrf.mxu0
    %v316 = vadd.f32 0.0, %v315
    %317 = vdwg.mxu0
    %318 = vmatpush.bf16.msra.mxu0 %v241
    %319 = vmatpush.bf16.msra.mxu0 %v238
    %320 = vmatpush.bf16.msra.mxu0 %v235
    %321 = vmatpush.bf16.msra.mxu0 %v232
    %322 = vmatpush.bf16.msra.mxu0 %v229
    %323 = vmatpush.bf16.msra.mxu0 %v226
    %324 = vmatpush.bf16.msra.mxu0 %v223
    %325 = vmatpush.bf16.msra.mxu0 %v220
    %326 = vmatmul.bf16.gmra.mxu0 %v267
    %v327 = vpop.f32.mrf.mxu0
    %v328 = vadd.f32 0.0, %v327
    %v329 = vpop.f32.mrf.mxu0
    %v330 = vadd.f32 0.0, %v329
    %331 = vmatmul.bf16.gmra.mxu0 %v268
    %v332 = vpop.f32.mrf.mxu0
    %v333 = vadd.f32 0.0, %v332
    %v334 = vpop.f32.mrf.mxu0
    %v335 = vadd.f32 0.0, %v334
    %336 = vmatmul.bf16.gmra.mxu0 %v269
    %v337 = vpop.f32.mrf.mxu0
    %v338 = vadd.f32 0.0, %v337
    %v339 = vpop.f32.mrf.mxu0
    %v340 = vadd.f32 0.0, %v339
    %341 = vmatmul.bf16.gmra.mxu0 %v270
    %v342 = vpop.f32.mrf.mxu0
    %v343 = vadd.f32 0.0, %v342
    %v344 = vpop.f32.mrf.mxu0
    %v345 = vadd.f32 0.0, %v344
    %346 = vmatmul.bf16.gmra.mxu0 %v271
    %v347 = vpop.f32.mrf.mxu0
    %v348 = vadd.f32 0.0, %v347
    %v349 = vpop.f32.mrf.mxu0
    %v350 = vadd.f32 0.0, %v349
    %351 = vmatmul.bf16.gmra.mxu0 %v272
    %v352 = vpop.f32.mrf.mxu0
    %v353 = vadd.f32 0.0, %v352
    %v354 = vpop.f32.mrf.mxu0
    %v355 = vadd.f32 0.0, %v354
    %356 = vdwg.mxu0
    %357 = vmatpush.bf16.msra.mxu0 %v242
    %358 = vmatpush.bf16.msra.mxu0 %v239
    %359 = vmatpush.bf16.msra.mxu0 %v236
    %360 = vmatpush.bf16.msra.mxu0 %v233
    %361 = vmatpush.bf16.msra.mxu0 %v230
    %362 = vmatpush.bf16.msra.mxu0 %v227
    %363 = vmatpush.bf16.msra.mxu0 %v224
    %364 = vmatpush.bf16.msra.mxu0 %v221
    %365 = vmatmul.bf16.gmra.mxu0 %v267
    %v366 = vpop.f32.mrf.mxu0
    %v367 = vadd.f32 0.0, %v366
    %v368 = vpop.f32.mrf.mxu0
    %v369 = vadd.f32 0.0, %v368
    %370 = vmatmul.bf16.gmra.mxu0 %v268
    %v371 = vpop.f32.mrf.mxu0
    %v372 = vadd.f32 0.0, %v371
    %v373 = vpop.f32.mrf.mxu0
    %v374 = vadd.f32 0.0, %v373
    %375 = vmatmul.bf16.gmra.mxu0 %v269
    %v376 = vpop.f32.mrf.mxu0
    %v377 = vadd.f32 0.0, %v376
    %v378 = vpop.f32.mrf.mxu0
    %v379 = vadd.f32 0.0, %v378
    %380 = vmatmul.bf16.gmra.mxu0 %v270
    %v381 = vpop.f32.mrf.mxu0
    %v382 = vadd.f32 0.0, %v381
    %v383 = vpop.f32.mrf.mxu0
    %v384 = vadd.f32 0.0, %v383
    %385 = vmatmul.bf16.gmra.mxu0 %v271
    %v386 = vpop.f32.mrf.mxu0
    %v387 = vadd.f32 0.0, %v386
    %v388 = vpop.f32.mrf.mxu0
    %v389 = vadd.f32 0.0, %v388
    %390 = vmatmul.bf16.gmra.mxu0 %v272
    %v391 = vpop.f32.mrf.mxu0
    %v392 = vadd.f32 0.0, %v391
    %v393 = vpop.f32.mrf.mxu0
    %v394 = vadd.f32 0.0, %v393
    %395 = vdwg.mxu0
    %v396 = vadd.f32 %v289, %v299
    %v397 = vadd.f32 %v328, %v338
    %v398 = vadd.f32 %v367, %v377
    %v399 = vadd.f32 %v291, %v301
    %v400 = vadd.f32 %v330, %v340
    %v401 = vadd.f32 %v369, %v379
    %v402 = vadd.f32 %v294, %v304
    %v403 = vadd.f32 %v333, %v343
    %v404 = vadd.f32 %v372, %v382
    %v405 = vadd.f32 %v296, %v306
    %v406 = vadd.f32 %v335, %v345
    %v407 = vadd.f32 %v374, %v384
    %v408 = vadd.f32 %v396, %v309
    %v409 = vadd.f32 %v397, %v348
    %v410 = vadd.f32 %v398, %v387
    %v411 = vadd.f32 %v399, %v311
    %v412 = vadd.f32 %v400, %v350
    %v413 = vadd.f32 %v401, %v389
    %v414 = vadd.f32 %v402, %v314
    %v415 = vadd.f32 %v403, %v353
    %v416 = vadd.f32 %v404, %v392
    %v417 = vadd.f32 %v405, %v316
    %v418 = vadd.f32 %v406, %v355
    %v419 = vadd.f32 %v407, %v394
    %v420 = vsub.f32 %v408, %v409
    %v421 = vsub.f32 %v411, %v412
    %v422 = vsub.f32 %v414, %v415
    %v423 = vsub.f32 %v417, %v418
    %v424 = vadd.f32 %v420, 1e-12
    %v425 = vadd.f32 %v421, 1e-12
    %v426 = vadd.f32 %v422, 1e-12
    %v427 = vadd.f32 %v423, 1e-12
    %v428 = vsub.f32 %v408, %v410
    %v429 = vsub.f32 %v411, %v413
    %v430 = vsub.f32 %v414, %v416
    %v431 = vsub.f32 %v417, %v419
    %v432 = vadd.f32 %v428, 1e-12
    %v433 = vadd.f32 %v429, 1e-12
    %v434 = vadd.f32 %v430, 1e-12
    %v435 = vadd.f32 %v431, 1e-12
    %v436 = vmul.f32 %v424, %v424
    %v437 = vmul.f32 %v425, %v425
    %v438 = vmul.f32 %v426, %v426
    %v439 = vmul.f32 %v427, %v427
    %v440 = vadd.f32 %v436, %v437
    %v441 = vadd.f32 %v440, %v438
    %v442 = vadd.f32 %v441, %v439
    %v443 = vrot.slane %v442, 4
    %v444 = vadd.f32 %v442, %v443
    %v445 = vrot.slane %v444, 2
    %v446 = vadd.f32 %v444, %v445
    %v447 = vrot.slane %v446, 1
    %v448 = vadd.f32 %v446, %v447
    %v449 = vrsqrt.pop %v448
    %v450 = vmul.f32 %v449, %v448
    %v451 = vmul.f32 %v450, %v449
    %v452 = vmul.f32 0.5, %v451
    %v453 = vsub.f32 1.5, %v452
    %v454 = vmul.f32 %v449, %v453
    %v455 = vmul.f32 %v448, %v454
    %vm456 = vcmp.eq.f32.partialorder %v448, inf
    %v457 = vsel %vm456, %v448, %v455
    %vm458 = vcmp.eq.f32.partialorder %v448, 0.0
    %v459 = vand.u32 %v448, 2147483648
    %v460 = vsel %vm458, %v459, %v457
    %v461 = vmul.f32 %v432, %v432
    %v462 = vmul.f32 %v433, %v433
    %v463 = vmul.f32 %v434, %v434
    %v464 = vmul.f32 %v435, %v435
    %v465 = vadd.f32 %v461, %v462
    %v466 = vadd.f32 %v465, %v463
    %v467 = vadd.f32 %v466, %v464
    %v468 = vrot.slane %v467, 4
    %v469 = vadd.f32 %v467, %v468
    %v470 = vrot.slane %v469, 2
    %v471 = vadd.f32 %v469, %v470
    %v472 = vrot.slane %v471, 1
    %v473 = vadd.f32 %v471, %v472
    %v474 = vrsqrt.pop %v473
    %v475 = vmul.f32 %v474, %v473
    %v476 = vmul.f32 %v475, %v474
    %v477 = vmul.f32 0.5, %v476
    %v478 = vsub.f32 1.5, %v477
    %v479 = vmul.f32 %v474, %v478
    %v480 = vmul.f32 %v473, %v479
    %vm481 = vcmp.eq.f32.partialorder %v473, inf
    %v482 = vsel %vm481, %v473, %v480
    %vm483 = vcmp.eq.f32.partialorder %v473, 0.0
    %v484 = vand.u32 %v473, 2147483648
    %v485 = vsel %vm483, %v484, %v482
    %v486 = vsub.f32 %v460, %v485
    %v487 = vadd.f32 %v486, 1.0
    %v488 = vmax.f32 %v487, 0.0
    %489 = vst [vmem:[#allocation7] sm:$0x1] %v460
    %490 = vst [vmem:[#allocation7 + $0x1] sm:$0x1] %v485
    %491 = vst [vmem:[#allocation7 + $0x2] sm:$0x1] %v488
    // Predicated region
    $region18: #{tpu_custom_call.1} parent=1 // pred_check
      _
    $region19: #{tpu_custom_call.1} parent=1 // pred_check_branch
      %493 = sbr.rel (0) target = $region21
    $region20: #{tpu_custom_call.1} parent=1 // pred_region
      %495 = vsyncadd [#allocation4], 0
      %s497 = sshll.u32 [#allocation7], 4
      %s498 = int_to_ptr.vmem [resolvable:$true] %s497
      %s499 = sshll.u32 %s2, 4
      %s500 = int_to_ptr.hbm [resolvable:$true] %s499
      %502 = dma.vmem_to_hbm [thread:$0]  %s498, 64, %s500, [#allocation4]
    $region21: #{tpu_custom_call.1} parent=1 // pred_fallthru
      _
    // Predicated region
    $region22: #{tpu_custom_call.1} parent=1 // pred_check
      _
    $region23: #{tpu_custom_call.1} parent=1 // pred_check_branch
      %504 = sbr.rel (0) target = $region25
    $region24: #{tpu_custom_call.1} parent=1 // pred_region
      %506 = dma.done [#allocation4], 64
    $region25: #{tpu_custom_call.1} parent=1 // pred_fallthru
      _
    %507 = vsyncpa [#allocation3], 1
    %508 = vsyncpa [#allocation6], 1
    %509 = vsyncpa [#allocation4], 1

</llo_original>
